<compile_context>
chip_gen: v7x
topology: tpu7x:2x2x1
jax: 0.10.0
libtpu: 0.0.40
codegen_flags: <defaults>
</compile_context>

<pallas_src>
import functools

import jax
import jax.numpy as jnp
from jax.experimental import pallas as pl
from jax.experimental.pallas import tpu as pltpu


def _round_up(x, m):
    return ((x + m - 1) // m) * m


def _vmem_budget():
    """(vmem_limit_bytes, max_fused_block_bytes) sized per TPU generation."""
    cap = 64 << 20                                  # conservative fallback (v7x per-TC)
    try:
        info = pltpu.get_tpu_info()
        c = getattr(info, "vmem_capacity_bytes", None)
        if c:
            cap = int(c)
    except Exception:
        pass
    vmem_limit = min(int(cap * 3 // 4), 100 << 20)  # v7x ~48 MiB, v5e/v6e ~96 MiB
    # fused working set ~ 2x in + 2x out + ~2 elementwise temps of one block each
    max_fused = vmem_limit // 7
    return vmem_limit, max_fused


# ----------------------------------------------------------------------------
# Kernels
# ----------------------------------------------------------------------------

def _laynormal_fused_kernel(x_ref, w_ref, b_ref, m1w_ref, m1b_ref, m2w_ref,
                            m2b_ref, o_ref, rescale_ref, rebias_ref, *, eps, inv_n):
    """Whole (C, H*W) plane of one sample in VMEM: single-pass stats + fused affine."""
    x = x_ref[0].astype(jnp.float32)                                    # (C, HW)
    # per-channel lane reduce first, one small sublane reduce after
    s = jnp.sum(jnp.sum(x, axis=1, keepdims=True), axis=0, keepdims=True)        # (1,1)
    ss = jnp.sum(jnp.sum(x * x, axis=1, keepdims=True), axis=0, keepdims=True)   # (1,1)
    mean = s * inv_n
    var = jnp.maximum(ss * inv_n - mean * mean, 0.0)
    std = jnp.sqrt(var + eps)
    inv_std = 1.0 / std

    w = w_ref[0].astype(jnp.float32)                                    # (C, 1)
    b = b_ref[0].astype(jnp.float32)                                    # (C, 1)
    alpha = w * inv_std                                                 # (C, 1)
    beta = b - mean * alpha                                             # (C, 1)
    o_ref[0] = (x * alpha + beta).astype(o_ref.dtype)                   # 1 FMA / elem

    rescale_ref[0] = (m1w_ref[0].astype(jnp.float32) * std
                      + m1b_ref[0].astype(jnp.float32)).astype(rescale_ref.dtype)
    rebias_ref[0] = (m2w_ref[0].astype(jnp.float32) * mean
                     + m2b_ref[0].astype(jnp.float32)).astype(rebias_ref.dtype)


def _laynormal_stats_kernel(x_ref, w_ref, b_ref, m1w_ref, m1b_ref, m2w_ref, m2b_ref,
                            alpha_ref, beta_ref, rescale_ref, rebias_ref,
                            sum_c, sumsq_c, shift_sc, *, eps, inv_n, hw, chunk):
    """Chunked pass 1: shifted sum / sum-of-squares accumulation over pixel chunks."""
    k = pl.program_id(1)
    x = x_ref[0].astype(jnp.float32)                                    # (C, T)
    c_dim, t_dim = x.shape
    lane = jax.lax.broadcasted_iota(jnp.int32, (c_dim, t_dim), 1)
    valid = (lane + k * chunk) < hw                                     # mask ragged tail

    @pl.when(k == 0)
    def _init():
        sum_c[...] = jnp.zeros_like(sum_c)
        sumsq_c[...] = jnp.zeros_like(sumsq_c)
        # shift = mean of the first chunk's valid elements (cancellation guard)
        xm0 = jnp.where(valid, x, 0.0)
        n0 = c_dim * min(hw, chunk)
        shift_sc[...] = jnp.sum(xm0, keepdims=True) * (1.0 / n0)

    shift = shift_sc[...]                                               # (1, 1)
    xs = jnp.where(valid, x - shift, 0.0)
    sum_c[...] += jnp.sum(xs, axis=1, keepdims=True)                    # (C, 1)
    sumsq_c[...] += jnp.sum(xs * xs, axis=1, keepdims=True)             # (C, 1)

    @pl.when(k == pl.num_programs(1) - 1)
    def _finalize():
        s = jnp.sum(sum_c[...], axis=0, keepdims=True)                  # (1, 1)
        ss = jnp.sum(sumsq_c[...], axis=0, keepdims=True)               # (1, 1)
        m_sh = s * inv_n                                                # mean(x) - shift
        var = jnp.maximum(ss * inv_n - m_sh * m_sh, 0.0)
        mean = m_sh + shift_sc[...]
        std = jnp.sqrt(var + eps)
        inv_std = 1.0 / std

        w = w_ref[0].astype(jnp.float32)                                # (C, 1)
        b = b_ref[0].astype(jnp.float32)
        alpha = w * inv_std
        alpha_ref[0] = alpha.astype(alpha_ref.dtype)
        beta_ref[0] = (b - mean * alpha).astype(beta_ref.dtype)
        rescale_ref[0] = (m1w_ref[0].astype(jnp.float32) * std
                          + m1b_ref[0].astype(jnp.float32)).astype(rescale_ref.dtype)
        rebias_ref[0] = (m2w_ref[0].astype(jnp.float32) * mean
                         + m2b_ref[0].astype(jnp.float32)).astype(rebias_ref.dtype)


def _laynormal_apply_kernel(x_ref, alpha_ref, beta_ref, o_ref):
    """Chunked pass 2: fully parallel fused affine, 1 FMA per element."""
    x = x_ref[0].astype(jnp.float32)                                    # (C, T)
    o_ref[0] = (x * alpha_ref[0] + beta_ref[0]).astype(o_ref.dtype)


# ----------------------------------------------------------------------------
# pallas_call wrappers
# ----------------------------------------------------------------------------

def _rln_fused(x2, w3, b3, m1w, m1b, m2w, m2b, *, eps, vmem_limit):
    B, C, HW = x2.shape
    kern = functools.partial(_laynormal_fused_kernel, eps=eps, inv_n=1.0 / (C * HW))
    return pl.pallas_call(
        kern,
        out_shape=(
            jax.ShapeDtypeStruct((B, C, HW), x2.dtype),
            jax.ShapeDtypeStruct((B, 1, C), jnp.float32),
            jax.ShapeDtypeStruct((B, 1, C), jnp.float32),
        ),
        grid_spec=pltpu.PrefetchScalarGridSpec(
            num_scalar_prefetch=0,
            grid=(B,),
            in_specs=[
                pl.BlockSpec((1, C, HW), lambda i: (i, 0, 0)),
                pl.BlockSpec((1, C, 1), lambda i: (0, 0, 0)),
                pl.BlockSpec((1, C, 1), lambda i: (0, 0, 0)),
                pl.BlockSpec((1, 1, C), lambda i: (0, 0, 0)),
                pl.BlockSpec((1, 1, C), lambda i: (0, 0, 0)),
                pl.BlockSpec((1, 1, C), lambda i: (0, 0, 0)),
                pl.BlockSpec((1, 1, C), lambda i: (0, 0, 0)),
            ],
            out_specs=[
                pl.BlockSpec((1, C, HW), lambda i: (i, 0, 0)),
                pl.BlockSpec((1, 1, C), lambda i: (i, 0, 0)),
                pl.BlockSpec((1, 1, C), lambda i: (i, 0, 0)),
            ],
        ),
        compiler_params=pltpu.CompilerParams(
            dimension_semantics=("parallel",),
            vmem_limit_bytes=int(vmem_limit)),
    )(x2, w3, b3, m1w, m1b, m2w, m2b)


def _rln_chunked(x2, w3, b3, m1w, m1b, m2w, m2b, *, eps, chunk_bytes):
    B, C, HW = x2.shape
    # chunk sized by bytes (~chunk_bytes of f32 per block), lane-dense multiple of 128
    t_target = max(128, ((chunk_bytes // (C * 4)) // 128) * 128)
    T = min(t_target, _round_up(HW, 128))
    n_chunks = pl.cdiv(HW, T)
    inv_n = 1.0 / (C * HW)

    stats_kern = functools.partial(_laynormal_stats_kernel, eps=eps, inv_n=inv_n,
                                   hw=HW, chunk=T)
    alpha, beta, rescale, rebias = pl.pallas_call(
        stats_kern,
        out_shape=(
            jax.ShapeDtypeStruct((B, C, 1), jnp.float32),
            jax.ShapeDtypeStruct((B, C, 1), jnp.float32),
            jax.ShapeDtypeStruct((B, 1, C), jnp.float32),
            jax.ShapeDtypeStruct((B, 1, C), jnp.float32),
        ),
        grid_spec=pltpu.PrefetchScalarGridSpec(
            num_scalar_prefetch=0,
            grid=(B, n_chunks),
            in_specs=[
                pl.BlockSpec((1, C, T), lambda b, k: (b, 0, k)),
                pl.BlockSpec((1, C, 1), lambda b, k: (0, 0, 0)),
                pl.BlockSpec((1, C, 1), lambda b, k: (0, 0, 0)),
                pl.BlockSpec((1, 1, C), lambda b, k: (0, 0, 0)),
                pl.BlockSpec((1, 1, C), lambda b, k: (0, 0, 0)),
                pl.BlockSpec((1, 1, C), lambda b, k: (0, 0, 0)),
                pl.BlockSpec((1, 1, C), lambda b, k: (0, 0, 0)),
            ],
            out_specs=[
                pl.BlockSpec((1, C, 1), lambda b, k: (b, 0, 0)),
                pl.BlockSpec((1, C, 1), lambda b, k: (b, 0, 0)),
                pl.BlockSpec((1, 1, C), lambda b, k: (b, 0, 0)),
                pl.BlockSpec((1, 1, C), lambda b, k: (b, 0, 0)),
            ],
            scratch_shapes=[pltpu.VMEM((C, 1), jnp.float32),
                            pltpu.VMEM((C, 1), jnp.float32),
                            pltpu.VMEM((1, 1), jnp.float32)],
        ),
        compiler_params=pltpu.CompilerParams(
            dimension_semantics=("parallel", "arbitrary")),
    )(x2, w3, b3, m1w, m1b, m2w, m2b)

    out2 = pl.pallas_call(
        _laynormal_apply_kernel,
        out_shape=jax.ShapeDtypeStruct((B, C, HW), x2.dtype),
        grid_spec=pltpu.PrefetchScalarGridSpec(
            num_scalar_prefetch=0,
            grid=(B, n_chunks),
            in_specs=[
                pl.BlockSpec((1, C, T), lambda b, k: (b, 0, k)),
                pl.BlockSpec((1, C, 1), lambda b, k: (b, 0, 0)),
                pl.BlockSpec((1, C, 1), lambda b, k: (b, 0, 0)),
            ],
            out_specs=pl.BlockSpec((1, C, T), lambda b, k: (b, 0, k)),
        ),
        compiler_params=pltpu.CompilerParams(
            dimension_semantics=("parallel", "parallel")),
    )(x2, alpha, beta)

    return out2, rescale, rebias


def laynormal_forward(x, params, eps=1e-5, *, max_fused_bytes=None,
                      chunk_bytes=2 << 20):
    """x: (B, C, H, W) NCHW -> (out (B,C,H,W), rescale (B,C,1,1), rebias (B,C,1,1))."""
    B, C, H, W = x.shape
    HW = H * W
    x2 = x.reshape(B, C, HW)                       # free reshape, no transpose

    w3 = params['weight'].reshape(1, C, 1).astype(jnp.float32)
    b3 = params['bias'].reshape(1, C, 1).astype(jnp.float32)
    m1w = params['meta1_w'].reshape(1, 1, C).astype(jnp.float32)
    m1b = params['meta1_b'].reshape(1, 1, C).astype(jnp.float32)
    m2w = params['meta2_w'].reshape(1, 1, C).astype(jnp.float32)
    m2b = params['meta2_b'].reshape(1, 1, C).astype(jnp.float32)

    vmem_limit, auto_fused = _vmem_budget()
    fused_budget = auto_fused if max_fused_bytes is None else max_fused_bytes
    block_bytes = C * HW * 4                       # f32 working block per sample
    if block_bytes <= fused_budget:
        out2, rescale, rebias = _rln_fused(x2, w3, b3, m1w, m1b, m2w, m2b,
                                           eps=eps, vmem_limit=vmem_limit)
    else:
        out2, rescale, rebias = _rln_chunked(x2, w3, b3, m1w, m1b, m2w, m2b,
                                             eps=eps, chunk_bytes=chunk_bytes)

    out = out2.reshape(B, C, H, W)
    return out, rescale.reshape(B, C, 1, 1), rebias.reshape(B, C, 1, 1)


# ----------------------------------------------------------------------------
# Reference + parameter init (mirrors the PyTorch module's init)
# ----------------------------------------------------------------------------

def laynormal_reference(x, params, eps=1e-5):
    mean = jnp.mean(x, axis=(1, 2, 3), keepdims=True)
    std = jnp.sqrt(jnp.mean((x - mean) ** 2, axis=(1, 2, 3), keepdims=True) + eps)
    C = x.shape[1]
    per_c = lambda a: a.reshape(1, C, 1, 1)
    out = (x - mean) / std * per_c(params['weight']) + per_c(params['bias'])
    rescale = per_c(params['meta1_w']) * std + per_c(params['meta1_b'])
    rebias = per_c(params['meta2_w']) * mean + per_c(params['meta2_b'])
    return out, rescale, rebias


def init_params(key, dim):
    k1, k2 = jax.random.split(key)
    # trunc_normal_(std=0.02) with |x|<=2 cutoff is numerically ~ N(0, 0.02)
    nrm = lambda k: jax.random.normal(k, (dim,), jnp.float32) * 0.02
    return {
        'weight': jnp.ones((dim,), jnp.float32),
        'bias': jnp.zeros((dim,), jnp.float32),
        'meta1_w': nrm(k1), 'meta1_b': jnp.ones((dim,), jnp.float32),
        'meta2_w': nrm(k2), 'meta2_b': jnp.zeros((dim,), jnp.float32),
    }


if __name__ == "__main__":
    key = jax.random.PRNGKey(0)
    eps = 1e-5
    B, C = 2, 4
    params = init_params(key, C)

    # (16,16): even tiles.  (16,15): HW=240 exercises the in-kernel ragged-tail mask.
    for (H, W) in ((16, 16), (16, 15)):
        x = jax.random.normal(jax.random.fold_in(key, H * W), (B, C, H, W), jnp.float32)
        ref = laynormal_reference(x, params, eps)

        # Fused single-pass fast path (1 HBM read + 1 write per sample).
        fused = jax.jit(functools.partial(laynormal_forward, eps=eps))(x, params)
        # Chunked two-pass fallback, forced with tiny chunks to exercise accumulation.
        chunked = jax.jit(functools.partial(
            laynormal_forward, eps=eps, max_fused_bytes=0, chunk_bytes=2048))(x, params)
        jax.block_until_ready((fused, chunked))

        for got_set in (fused, chunked):
            for got, want in zip(got_set, ref):
                assert got.shape == want.shape and got.dtype == want.dtype
                assert jnp.allclose(got, want, atol=1e-4, rtol=1e-4), (
                    float(jnp.max(jnp.abs(got - want))))

    print("KERNEL_OK")
</pallas_src>

<mosaic_0001>
module attributes {stable_mosaic.version = 11 : i64} {
  func.func @_laynormal_fused_kernel(%arg0: i32, %arg1: memref<1x4x256xf32, #tpu.memory_space<vmem>>, %arg2: memref<1x4x1xf32, #tpu.memory_space<vmem>>, %arg3: memref<1x4x1xf32, #tpu.memory_space<vmem>>, %arg4: memref<1x1x4xf32, #tpu.memory_space<vmem>>, %arg5: memref<1x1x4xf32, #tpu.memory_space<vmem>>, %arg6: memref<1x1x4xf32, #tpu.memory_space<vmem>>, %arg7: memref<1x1x4xf32, #tpu.memory_space<vmem>>, %arg8: memref<1x4x256xf32, #tpu.memory_space<vmem>>, %arg9: memref<1x1x4xf32, #tpu.memory_space<vmem>>, %arg10: memref<1x1x4xf32, #tpu.memory_space<vmem>>) attributes {dimension_semantics = [#tpu.dimension_semantics<parallel>], iteration_bounds = array<i64: 2>, scalar_prefetch = 0 : i64, scratch_operands = 0 : i64, tpu.core_type = #tpu.core_type<tc>, window_params = [{transform_indices = @transform_0, window_bounds = array<i64: 1, 4, 256>}, {pipeline_mode = #tpu.pipeline_mode<synchronous>, transform_indices = @transform_1, window_bounds = array<i64: 1, 4, 1>}, {pipeline_mode = #tpu.pipeline_mode<synchronous>, transform_indices = @transform_2, window_bounds = array<i64: 1, 4, 1>}, {pipeline_mode = #tpu.pipeline_mode<synchronous>, transform_indices = @transform_3, window_bounds = array<i64: 1, 1, 4>}, {pipeline_mode = #tpu.pipeline_mode<synchronous>, transform_indices = @transform_4, window_bounds = array<i64: 1, 1, 4>}, {pipeline_mode = #tpu.pipeline_mode<synchronous>, transform_indices = @transform_5, window_bounds = array<i64: 1, 1, 4>}, {pipeline_mode = #tpu.pipeline_mode<synchronous>, transform_indices = @transform_6, window_bounds = array<i64: 1, 1, 4>}, {transform_indices = @transform_7, window_bounds = array<i64: 1, 4, 256>}, {transform_indices = @transform_8, window_bounds = array<i64: 1, 1, 4>}, {transform_indices = @transform_9, window_bounds = array<i64: 1, 1, 4>}]} {
    %c0 = arith.constant 0 : index
    %c0_0 = arith.constant 0 : index
    %c0_1 = arith.constant 0 : index
    %0 = vector.load %arg1[%c0, %c0_0, %c0_1] : memref<1x4x256xf32, #tpu.memory_space<vmem>>, vector<1x4x256xf32>
    %1 = vector.shape_cast %0 : vector<1x4x256xf32> to vector<4x256xf32>
    %cst = arith.constant dense<0.000000e+00> : vector<4xf32>
    %2 = vector.multi_reduction <add>, %1, %cst [1] : vector<4x256xf32> to vector<4xf32>
    %3 = vector.shape_cast %2 : vector<4xf32> to vector<4x1xf32>
    %cst_2 = arith.constant dense<0.000000e+00> : vector<1xf32>
    %4 = vector.multi_reduction <add>, %3, %cst_2 [0] : vector<4x1xf32> to vector<1xf32>
    %5 = vector.shape_cast %4 : vector<1xf32> to vector<1x1xf32>
    %6 = arith.mulf %1, %1 : vector<4x256xf32>
    %cst_3 = arith.constant dense<0.000000e+00> : vector<4xf32>
    %7 = vector.multi_reduction <add>, %6, %cst_3 [1] : vector<4x256xf32> to vector<4xf32>
    %8 = vector.shape_cast %7 : vector<4xf32> to vector<4x1xf32>
    %cst_4 = arith.constant dense<0.000000e+00> : vector<1xf32>
    %9 = vector.multi_reduction <add>, %8, %cst_4 [0] : vector<4x1xf32> to vector<1xf32>
    %10 = vector.shape_cast %9 : vector<1xf32> to vector<1x1xf32>
    %cst_5 = arith.constant 9.765625E-4 : f32
    %11 = vector.broadcast %cst_5 : f32 to vector<1x1xf32>
    %12 = arith.mulf %5, %11 : vector<1x1xf32>
    %cst_6 = arith.constant 9.765625E-4 : f32
    %13 = vector.broadcast %cst_6 : f32 to vector<1x1xf32>
    %14 = arith.mulf %10, %13 : vector<1x1xf32>
    %15 = arith.mulf %12, %12 : vector<1x1xf32>
    %16 = arith.subf %14, %15 : vector<1x1xf32>
    %cst_7 = arith.constant 0.000000e+00 : f32
    %17 = vector.broadcast %cst_7 : f32 to vector<1x1xf32>
    %18 = arith.maximumf %16, %17 : vector<1x1xf32>
    %cst_8 = arith.constant 9.99999974E-6 : f32
    %19 = vector.broadcast %cst_8 : f32 to vector<1x1xf32>
    %20 = arith.addf %18, %19 : vector<1x1xf32>
    %21 = math.sqrt %20 : vector<1x1xf32>
    %cst_9 = arith.constant 1.000000e+00 : f32
    %22 = vector.broadcast %cst_9 : f32 to vector<1x1xf32>
    %23 = arith.divf %22, %21 : vector<1x1xf32>
    %c0_10 = arith.constant 0 : index
    %c0_11 = arith.constant 0 : index
    %c0_12 = arith.constant 0 : index
    %24 = vector.load %arg2[%c0_10, %c0_11, %c0_12] : memref<1x4x1xf32, #tpu.memory_space<vmem>>, vector<1x4x1xf32>
    %25 = vector.shape_cast %24 : vector<1x4x1xf32> to vector<4x1xf32>
    %c0_13 = arith.constant 0 : index
    %c0_14 = arith.constant 0 : index
    %c0_15 = arith.constant 0 : index
    %26 = vector.load %arg3[%c0_13, %c0_14, %c0_15] : memref<1x4x1xf32, #tpu.memory_space<vmem>>, vector<1x4x1xf32>
    %27 = vector.shape_cast %26 : vector<1x4x1xf32> to vector<4x1xf32>
    %28 = vector.broadcast %23 : vector<1x1xf32> to vector<4x1xf32>
    %29 = arith.mulf %25, %28 : vector<4x1xf32>
    %30 = vector.broadcast %12 : vector<1x1xf32> to vector<4x1xf32>
    %31 = arith.mulf %30, %29 : vector<4x1xf32>
    %32 = arith.subf %27, %31 : vector<4x1xf32>
    %33 = vector.broadcast %29 : vector<4x1xf32> to vector<4x256xf32>
    %34 = arith.mulf %1, %33 : vector<4x256xf32>
    %35 = vector.broadcast %32 : vector<4x1xf32> to vector<4x256xf32>
    %36 = arith.addf %34, %35 : vector<4x256xf32>
    %c0_16 = arith.constant 0 : index
    %c0_17 = arith.constant 0 : index
    %c0_18 = arith.constant 0 : index
    %37 = vector.load %arg8[%c0_16, %c0_17, %c0_18] : memref<1x4x256xf32, #tpu.memory_space<vmem>>, vector<1x4x256xf32>
    %38 = vector.shape_cast %37 : vector<1x4x256xf32> to vector<4x256xf32>
    %39 = vector.shape_cast %36 : vector<4x256xf32> to vector<1x4x256xf32>
    tpu.vector_store %arg8[%c0_16, %c0_17, %c0_18], %39 {strides = array<i32>} : memref<1x4x256xf32, #tpu.memory_space<vmem>>, vector<1x4x256xf32>,
    %c0_19 = arith.constant 0 : index
    %c0_20 = arith.constant 0 : index
    %c0_21 = arith.constant 0 : index
    %40 = vector.load %arg4[%c0_19, %c0_20, %c0_21] : memref<1x1x4xf32, #tpu.memory_space<vmem>>, vector<1x1x4xf32>
    %41 = vector.shape_cast %40 : vector<1x1x4xf32> to vector<1x4xf32>
    %42 = vector.broadcast %21 : vector<1x1xf32> to vector<1x4xf32>
    %43 = arith.mulf %41, %42 : vector<1x4xf32>
    %c0_22 = arith.constant 0 : index
    %c0_23 = arith.constant 0 : index
    %c0_24 = arith.constant 0 : index
    %44 = vector.load %arg5[%c0_22, %c0_23, %c0_24] : memref<1x1x4xf32, #tpu.memory_space<vmem>>, vector<1x1x4xf32>
    %45 = vector.shape_cast %44 : vector<1x1x4xf32> to vector<1x4xf32>
    %46 = arith.addf %43, %45 : vector<1x4xf32>
    %c0_25 = arith.constant 0 : index
    %c0_26 = arith.constant 0 : index
    %c0_27 = arith.constant 0 : index
    %47 = vector.load %arg9[%c0_25, %c0_26, %c0_27] : memref<1x1x4xf32, #tpu.memory_space<vmem>>, vector<1x1x4xf32>
    %48 = vector.shape_cast %47 : vector<1x1x4xf32> to vector<1x4xf32>
    %49 = vector.shape_cast %46 : vector<1x4xf32> to vector<1x1x4xf32>
    tpu.vector_store %arg9[%c0_25, %c0_26, %c0_27], %49 {strides = array<i32>} : memref<1x1x4xf32, #tpu.memory_space<vmem>>, vector<1x1x4xf32>,
    %c0_28 = arith.constant 0 : index
    %c0_29 = arith.constant 0 : index
    %c0_30 = arith.constant 0 : index
    %50 = vector.load %arg6[%c0_28, %c0_29, %c0_30] : memref<1x1x4xf32, #tpu.memory_space<vmem>>, vector<1x1x4xf32>
    %51 = vector.shape_cast %50 : vector<1x1x4xf32> to vector<1x4xf32>
    %52 = vector.broadcast %12 : vector<1x1xf32> to vector<1x4xf32>
    %53 = arith.mulf %51, %52 : vector<1x4xf32>
    %c0_31 = arith.constant 0 : index
    %c0_32 = arith.constant 0 : index
    %c0_33 = arith.constant 0 : index
    %54 = vector.load %arg7[%c0_31, %c0_32, %c0_33] : memref<1x1x4xf32, #tpu.memory_space<vmem>>, vector<1x1x4xf32>
    %55 = vector.shape_cast %54 : vector<1x1x4xf32> to vector<1x4xf32>
    %56 = arith.addf %53, %55 : vector<1x4xf32>
    %c0_34 = arith.constant 0 : index
    %c0_35 = arith.constant 0 : index
    %c0_36 = arith.constant 0 : index
    %57 = vector.load %arg10[%c0_34, %c0_35, %c0_36] : memref<1x1x4xf32, #tpu.memory_space<vmem>>, vector<1x1x4xf32>
    %58 = vector.shape_cast %57 : vector<1x1x4xf32> to vector<1x4xf32>
    %59 = vector.shape_cast %56 : vector<1x4xf32> to vector<1x1x4xf32>
    tpu.vector_store %arg10[%c0_34, %c0_35, %c0_36], %59 {strides = array<i32>} : memref<1x1x4xf32, #tpu.memory_space<vmem>>, vector<1x1x4xf32>,
    return
  }
  func.func @transform_0(%arg0: i32) -> (i32, i32, i32) {
    %c0_i32 = arith.constant 0 : i32
    %c0_i32_0 = arith.constant 0 : i32
    %c0_i32_1 = arith.constant 0 : i32
    return %arg0, %c0_i32, %c0_i32_0 : i32, i32, i32
  }
  func.func @transform_1(%arg0: i32) -> (i32, i32, i32) {
    %c0_i32 = arith.constant 0 : i32
    %c0_i32_0 = arith.constant 0 : i32
    %c0_i32_1 = arith.constant 0 : i32
    %c0_i32_2 = arith.constant 0 : i32
    return %c0_i32, %c0_i32_0, %c0_i32_1 : i32, i32, i32
  }
  func.func @transform_2(%arg0: i32) -> (i32, i32, i32) {
    %c0_i32 = arith.constant 0 : i32
    %c0_i32_0 = arith.constant 0 : i32
    %c0_i32_1 = arith.constant 0 : i32
    %c0_i32_2 = arith.constant 0 : i32
    return %c0_i32, %c0_i32_0, %c0_i32_1 : i32, i32, i32
  }
  func.func @transform_3(%arg0: i32) -> (i32, i32, i32) {
    %c0_i32 = arith.constant 0 : i32
    %c0_i32_0 = arith.constant 0 : i32
    %c0_i32_1 = arith.constant 0 : i32
    %c0_i32_2 = arith.constant 0 : i32
    return %c0_i32, %c0_i32_0, %c0_i32_1 : i32, i32, i32
  }
  func.func @transform_4(%arg0: i32) -> (i32, i32, i32) {
    %c0_i32 = arith.constant 0 : i32
    %c0_i32_0 = arith.constant 0 : i32
    %c0_i32_1 = arith.constant 0 : i32
    %c0_i32_2 = arith.constant 0 : i32
    return %c0_i32, %c0_i32_0, %c0_i32_1 : i32, i32, i32
  }
  func.func @transform_5(%arg0: i32) -> (i32, i32, i32) {
    %c0_i32 = arith.constant 0 : i32
    %c0_i32_0 = arith.constant 0 : i32
    %c0_i32_1 = arith.constant 0 : i32
    %c0_i32_2 = arith.constant 0 : i32
    return %c0_i32, %c0_i32_0, %c0_i32_1 : i32, i32, i32
  }
  func.func @transform_6(%arg0: i32) -> (i32, i32, i32) {
    %c0_i32 = arith.constant 0 : i32
    %c0_i32_0 = arith.constant 0 : i32
    %c0_i32_1 = arith.constant 0 : i32
    %c0_i32_2 = arith.constant 0 : i32
    return %c0_i32, %c0_i32_0, %c0_i32_1 : i32, i32, i32
  }
  func.func @transform_7(%arg0: i32) -> (i32, i32, i32) {
    %c0_i32 = arith.constant 0 : i32
    %c0_i32_0 = arith.constant 0 : i32
    %c0_i32_1 = arith.constant 0 : i32
    return %arg0, %c0_i32, %c0_i32_0 : i32, i32, i32
  }
  func.func @transform_8(%arg0: i32) -> (i32, i32, i32) {
    %c0_i32 = arith.constant 0 : i32
    %c0_i32_0 = arith.constant 0 : i32
    %c0_i32_1 = arith.constant 0 : i32
    return %arg0, %c0_i32, %c0_i32_0 : i32, i32, i32
  }
  func.func @transform_9(%arg0: i32) -> (i32, i32, i32) {
    %c0_i32 = arith.constant 0 : i32
    %c0_i32_0 = arith.constant 0 : i32
    %c0_i32_1 = arith.constant 0 : i32
    return %arg0, %c0_i32, %c0_i32_0 : i32, i32, i32
  }
}

</mosaic_0001>

<llo_original>
// kernel: laynormal_forward.1
$region0: #{laynormal_forward.1}
  #allocation0 [shape = 'u32[]', space=smem, size = 0x4, offset = 0x4, fixed_abs, tag = 'smem constant byte address 0x4 - core index']
  #allocation1 [shape = 'u32[144,128]{1,0:T(1,128)}', space=vmem, size = 0x12000, scoped, tag = 'internal scratch']
  %s0 = inlined_call_operand.vmem [shape: f32[2,4,256], index: 0, kind: input, shape index: {}]
  %s1 = inlined_call_operand.vmem [shape: f32[1,4,1], index: 1, kind: input, shape index: {}]
  %s2 = inlined_call_operand.vmem [shape: f32[1,4,1], index: 2, kind: input, shape index: {}]
  %s3 = inlined_call_operand.vmem [shape: f32[1,1,4], index: 3, kind: input, shape index: {}]
  %s4 = inlined_call_operand.vmem [shape: f32[1,1,4], index: 4, kind: input, shape index: {}]
  %s5 = inlined_call_operand.vmem [shape: f32[1,1,4], index: 5, kind: input, shape index: {}]
  %s6 = inlined_call_operand.vmem [shape: f32[1,1,4], index: 6, kind: input, shape index: {}]
  %s7 = inlined_call_operand.vmem [shape: f32[2,4,256], index: 7, kind: output, shape index: {0}]
  %s8 = inlined_call_operand.hbm [shape: f32[2,1,4], index: 8, kind: output, shape index: {1}]
  %s9 = inlined_call_operand.hbm [shape: f32[2,1,4], index: 9, kind: output, shape index: {2}]
  %10 = xla_tuple %s7, %s8, %s9
  %s11 = sld [smem:[#allocation0]]
  $region77: #{laynormal_forward.1} parent=0
    _
  %s13 = ssub.s32 1, %s11
  %s14 = scalar_select 0, %s13, %s11
  $region1: #{laynormal_forward.1} parent=0
    #allocation2 [shape = 'u8[1024]{0}', space=vmem, size = 0x400, scoped, tag = 'output window, operand 1']
    #allocation3 [shape = 's32[2]{0}', space=sflag, size = 0x8, scoped, tag = 'scoped memory for laynormal_forward.1']
    #allocation4 [shape = 'u8[1024]{0}', space=vmem, size = 0x400, scoped, tag = 'output window, operand 2']
    #allocation5 [shape = 's32[2]{0}', space=sflag, size = 0x8, scoped, tag = 'scoped memory for laynormal_forward.1']
    %15 = vsyncpa [#allocation3], 0
    %s16 = scalar_lea.sflag [#allocation3], 1
    %17 = vsyncpa %s16, 0
    %18 = vsyncpa [#allocation5], 0
    %s19 = scalar_lea.sflag [#allocation5], 1
    %20 = vsyncpa %s19, 0
    loop: start=0, step=1, limit=4
    $region2: #{laynormal_forward.1} parent=1 // loop_pre_header
      _
    $region3: #{laynormal_forward.1} parent=1 // loop_header
      %s22 = sphi 0, %s26
      %p23 = scmp.ge.s32.totalorder %s22, 4
      %s32 = sphi 0, %s34
      %s35 = sphi 0, %s32
      %s36 = sphi 0, %s35
      %s52 = sphi 0, %s36
      %s56 = sphi 0, %s56
      %s58 = sphi 0, %s56
      %s59 = sphi 0, %s58
      %s73 = sphi 0, %s59
      %s77 = sphi 0, %s77
      %s79 = sphi 0, %s77
      %s80 = sphi 0, %s79
      %s94 = sphi 0, %s80
      %s98 = sphi 0, %s98
      %s100 = sphi 0, %s98
      %s101 = sphi 0, %s100
      %s115 = sphi 0, %s101
      %s119 = sphi 0, %s119
      %s121 = sphi 0, %s119
      %s122 = sphi 0, %s121
      %s136 = sphi 0, %s122
      %s140 = sphi 0, %s140
      %s142 = sphi 0, %s140
      %s143 = sphi 0, %s142
      %s157 = sphi 0, %s143
      %s161 = sphi 0, %s161
      %s163 = sphi 0, %s161
      %s164 = sphi 0, %s163
      %s178 = sphi 0, %s164
      %s184 = sphi 0, %s186
      %s187 = sphi 0, %s184
      %s188 = sphi 0, %s187
      %s204 = sphi 0, %s188
      %s210 = sphi 0, %s212
      %s213 = sphi 0, %s210
      %s214 = sphi 0, %s213
      %s230 = sphi 0, %s214
      %s236 = sphi 0, %s238
      %s239 = sphi 0, %s236
      %s240 = sphi 0, %s239
      %s256 = sphi 0, %s240
    $region4: #{laynormal_forward.1} parent=1 // loop_header_branch
      %25 = sbr.rel (%p23) target = $region8
    $region5: #{laynormal_forward.1} parent=1 // loop_body
      %s27 = ssub.s32 %s22, 1
      %s28 = ssub.s32 %s22, 2
      %s29 = sadd.s32 %s22, 1
      %s30 = ssub.s32 %s22, %s29
      %p31 = scmp.eq.s32.totalorder %s30, 0
      %s33 = sadd.s32 %s32, 1
      %s34 = scalar_select %p31, %s32, %s33
      %p37 = pneg %p31
      %p38 = scmp.eq.s32.totalorder %s22, 1
      %p39 = por %p37, %p38
      %p40 = scmp.ne.s32.totalorder %s32, %s35
      %p41 = scmp.eq.s32.totalorder %s22, 0
      %p42 = por %p40, %p41
      %p43 = scmp.ne.s32.totalorder %s32, %s35
      %p44 = scmp.eq.s32.totalorder %s27, 1
      %p45 = por %p43, %p44
      %p46 = scmp.ne.s32.totalorder %s35, %s36
      %p47 = scmp.eq.s32.totalorder %s27, 0
      %p48 = por %p46, %p47
      %p49 = scmp.ne.s32.totalorder %s35, %s36
      %p50 = scmp.eq.s32.totalorder %s28, 1
      %p51 = por %p49, %p50
      %p53 = scmp.ne.s32.totalorder %s36, %s52
      %p54 = scmp.eq.s32.totalorder %s28, 0
      %p55 = por %p53, %p54
      %s57 = sadd.s32 %s56, 1
      %p60 = scmp.eq.s32.totalorder %s22, 1
      %p61 = scmp.ne.s32.totalorder %s56, %s58
      %p62 = scmp.eq.s32.totalorder %s22, 0
      %p63 = por %p61, %p62
      %p64 = scmp.ne.s32.totalorder %s56, %s58
      %p65 = scmp.eq.s32.totalorder %s27, 1
      %p66 = por %p64, %p65
      %p67 = scmp.ne.s32.totalorder %s58, %s59
      %p68 = scmp.eq.s32.totalorder %s27, 0
      %p69 = por %p67, %p68
      %p70 = scmp.ne.s32.totalorder %s58, %s59
      %p71 = scmp.eq.s32.totalorder %s28, 1
      %p72 = por %p70, %p71
      %p74 = scmp.ne.s32.totalorder %s59, %s73
      %p75 = scmp.eq.s32.totalorder %s28, 0
      %p76 = por %p74, %p75
      %s78 = sadd.s32 %s77, 1
      %p81 = scmp.eq.s32.totalorder %s22, 1
      %p82 = scmp.ne.s32.totalorder %s77, %s79
      %p83 = scmp.eq.s32.totalorder %s22, 0
      %p84 = por %p82, %p83
      %p85 = scmp.ne.s32.totalorder %s77, %s79
      %p86 = scmp.eq.s32.totalorder %s27, 1
      %p87 = por %p85, %p86
      %p88 = scmp.ne.s32.totalorder %s79, %s80
      %p89 = scmp.eq.s32.totalorder %s27, 0
      %p90 = por %p88, %p89
      %p91 = scmp.ne.s32.totalorder %s79, %s80
      %p92 = scmp.eq.s32.totalorder %s28, 1
      %p93 = por %p91, %p92
      %p95 = scmp.ne.s32.totalorder %s80, %s94
      %p96 = scmp.eq.s32.totalorder %s28, 0
      %p97 = por %p95, %p96
      %s99 = sadd.s32 %s98, 1
      %p102 = scmp.eq.s32.totalorder %s22, 1
      %p103 = scmp.ne.s32.totalorder %s98, %s100
      %p104 = scmp.eq.s32.totalorder %s22, 0
      %p105 = por %p103, %p104
      %p106 = scmp.ne.s32.totalorder %s98, %s100
      %p107 = scmp.eq.s32.totalorder %s27, 1
      %p108 = por %p106, %p107
      %p109 = scmp.ne.s32.totalorder %s100, %s101
      %p110 = scmp.eq.s32.totalorder %s27, 0
      %p111 = por %p109, %p110
      %p112 = scmp.ne.s32.totalorder %s100, %s101
      %p113 = scmp.eq.s32.totalorder %s28, 1
      %p114 = por %p112, %p113
      %p116 = scmp.ne.s32.totalorder %s101, %s115
      %p117 = scmp.eq.s32.totalorder %s28, 0
      %p118 = por %p116, %p117
      %s120 = sadd.s32 %s119, 1
      %p123 = scmp.eq.s32.totalorder %s22, 1
      %p124 = scmp.ne.s32.totalorder %s119, %s121
      %p125 = scmp.eq.s32.totalorder %s22, 0
      %p126 = por %p124, %p125
      %p127 = scmp.ne.s32.totalorder %s119, %s121
      %p128 = scmp.eq.s32.totalorder %s27, 1
      %p129 = por %p127, %p128
      %p130 = scmp.ne.s32.totalorder %s121, %s122
      %p131 = scmp.eq.s32.totalorder %s27, 0
      %p132 = por %p130, %p131
      %p133 = scmp.ne.s32.totalorder %s121, %s122
      %p134 = scmp.eq.s32.totalorder %s28, 1
      %p135 = por %p133, %p134
      %p137 = scmp.ne.s32.totalorder %s122, %s136
      %p138 = scmp.eq.s32.totalorder %s28, 0
      %p139 = por %p137, %p138
      %s141 = sadd.s32 %s140, 1
      %p144 = scmp.eq.s32.totalorder %s22, 1
      %p145 = scmp.ne.s32.totalorder %s140, %s142
      %p146 = scmp.eq.s32.totalorder %s22, 0
      %p147 = por %p145, %p146
      %p148 = scmp.ne.s32.totalorder %s140, %s142
      %p149 = scmp.eq.s32.totalorder %s27, 1
      %p150 = por %p148, %p149
      %p151 = scmp.ne.s32.totalorder %s142, %s143
      %p152 = scmp.eq.s32.totalorder %s27, 0
      %p153 = por %p151, %p152
      %p154 = scmp.ne.s32.totalorder %s142, %s143
      %p155 = scmp.eq.s32.totalorder %s28, 1
      %p156 = por %p154, %p155
      %p158 = scmp.ne.s32.totalorder %s143, %s157
      %p159 = scmp.eq.s32.totalorder %s28, 0
      %p160 = por %p158, %p159
      %s162 = sadd.s32 %s161, 1
      %p165 = scmp.eq.s32.totalorder %s22, 1
      %p166 = scmp.ne.s32.totalorder %s161, %s163
      %p167 = scmp.eq.s32.totalorder %s22, 0
      %p168 = por %p166, %p167
      %p169 = scmp.ne.s32.totalorder %s161, %s163
      %p170 = scmp.eq.s32.totalorder %s27, 1
      %p171 = por %p169, %p170
      %p172 = scmp.ne.s32.totalorder %s163, %s164
      %p173 = scmp.eq.s32.totalorder %s27, 0
      %p174 = por %p172, %p173
      %p175 = scmp.ne.s32.totalorder %s163, %s164
      %p176 = scmp.eq.s32.totalorder %s28, 1
      %p177 = por %p175, %p176
      %p179 = scmp.ne.s32.totalorder %s164, %s178
      %p180 = scmp.eq.s32.totalorder %s28, 0
      %p181 = por %p179, %p180
      %s182 = ssub.s32 %s22, %s29
      %p183 = scmp.eq.s32.totalorder %s182, 0
      %s185 = sadd.s32 %s184, 1
      %s186 = scalar_select %p183, %s184, %s185
      %p189 = pneg %p183
      %p190 = scmp.eq.s32.totalorder %s22, 1
      %p191 = por %p189, %p190
      %p192 = scmp.ne.s32.totalorder %s184, %s187
      %p193 = scmp.eq.s32.totalorder %s22, 0
      %p194 = por %p192, %p193
      %p195 = scmp.ne.s32.totalorder %s184, %s187
      %p196 = scmp.eq.s32.totalorder %s27, 1
      %p197 = por %p195, %p196
      %p198 = scmp.ne.s32.totalorder %s187, %s188
      %p199 = scmp.eq.s32.totalorder %s27, 0
      %p200 = por %p198, %p199
      %p201 = scmp.ne.s32.totalorder %s187, %s188
      %p202 = scmp.eq.s32.totalorder %s28, 1
      %p203 = por %p201, %p202
      %p205 = scmp.ne.s32.totalorder %s188, %s204
      %p206 = scmp.eq.s32.totalorder %s28, 0
      %p207 = por %p205, %p206
      %s208 = ssub.s32 %s22, %s29
      %p209 = scmp.eq.s32.totalorder %s208, 0
      %s211 = sadd.s32 %s210, 1
      %s212 = scalar_select %p209, %s210, %s211
      %p215 = pneg %p209
      %p216 = scmp.eq.s32.totalorder %s22, 1
      %p217 = por %p215, %p216
      %p218 = scmp.ne.s32.totalorder %s210, %s213
      %p219 = scmp.eq.s32.totalorder %s22, 0
      %p220 = por %p218, %p219
      %p221 = scmp.ne.s32.totalorder %s210, %s213
      %p222 = scmp.eq.s32.totalorder %s27, 1
      %p223 = por %p221, %p222
      %p224 = scmp.ne.s32.totalorder %s213, %s214
      %p225 = scmp.eq.s32.totalorder %s27, 0
      %p226 = por %p224, %p225
      %p227 = scmp.ne.s32.totalorder %s213, %s214
      %p228 = scmp.eq.s32.totalorder %s28, 1
      %p229 = por %p227, %p228
      %p231 = scmp.ne.s32.totalorder %s214, %s230
      %p232 = scmp.eq.s32.totalorder %s28, 0
      %p233 = por %p231, %p232
      %s234 = ssub.s32 %s22, %s29
      %p235 = scmp.eq.s32.totalorder %s234, 0
      %s237 = sadd.s32 %s236, 1
      %s238 = scalar_select %p235, %s236, %s237
      %p241 = pneg %p235
      %p242 = scmp.eq.s32.totalorder %s22, 1
      %p243 = por %p241, %p242
      %p244 = scmp.ne.s32.totalorder %s236, %s239
      %p245 = scmp.eq.s32.totalorder %s22, 0
      %p246 = por %p244, %p245
      %p247 = scmp.ne.s32.totalorder %s236, %s239
      %p248 = scmp.eq.s32.totalorder %s27, 1
      %p249 = por %p247, %p248
      %p250 = scmp.ne.s32.totalorder %s239, %s240
      %p251 = scmp.eq.s32.totalorder %s27, 0
      %p252 = por %p250, %p251
      %p253 = scmp.ne.s32.totalorder %s239, %s240
      %p254 = scmp.eq.s32.totalorder %s28, 1
      %p255 = por %p253, %p254
      %p257 = scmp.ne.s32.totalorder %s240, %s256
      %p258 = scmp.eq.s32.totalorder %s28, 0
      %p259 = por %p257, %p258
      %p260 = scmp.le.s32.totalorder 1, %s22
      %p261 = scmp.lt.s32.totalorder %s22, 3
      %p262 = pnand %p260, %p261
      %p263 = pneg %p262
      // Predicated region
      $region9: #{laynormal_forward.1} parent=5 // pred_check
        _
      $region10: #{laynormal_forward.1} parent=5 // pred_check_branch
        %265 = sbr.rel (%p262) target = $region12
      $region11: #{laynormal_forward.1} parent=5 // pred_region
        %s266 = ssub.s32 %s22, 1
        // Predicated region
        $region13: #{laynormal_forward.1} parent=11 // pred_check
          %p267 = pneg %p69
        $region14: #{laynormal_forward.1} parent=11 // pred_check_branch
          %269 = sbr.rel (%p267) target = $region16
        $region15: #{laynormal_forward.1} parent=11 // pred_region
          _
        $region16: #{laynormal_forward.1} parent=11 // pred_fallthru
          _
        // Predicated region
        $region17: #{laynormal_forward.1} parent=11 // pred_check
          %p270 = pneg %p90
        $region18: #{laynormal_forward.1} parent=11 // pred_check_branch
          %272 = sbr.rel (%p270) target = $region20
        $region19: #{laynormal_forward.1} parent=11 // pred_region
          _
        $region20: #{laynormal_forward.1} parent=11 // pred_fallthru
          _
        // Predicated region
        $region21: #{laynormal_forward.1} parent=11 // pred_check
          %p273 = pneg %p111
        $region22: #{laynormal_forward.1} parent=11 // pred_check_branch
          %275 = sbr.rel (%p273) target = $region24
        $region23: #{laynormal_forward.1} parent=11 // pred_region
          _
        $region24: #{laynormal_forward.1} parent=11 // pred_fallthru
          _
        // Predicated region
        $region25: #{laynormal_forward.1} parent=11 // pred_check
          %p276 = pneg %p132
        $region26: #{laynormal_forward.1} parent=11 // pred_check_branch
          %278 = sbr.rel (%p276) target = $region28
        $region27: #{laynormal_forward.1} parent=11 // pred_region
          _
        $region28: #{laynormal_forward.1} parent=11 // pred_fallthru
          _
        // Predicated region
        $region29: #{laynormal_forward.1} parent=11 // pred_check
          %p279 = pneg %p153
        $region30: #{laynormal_forward.1} parent=11 // pred_check_branch
          %281 = sbr.rel (%p279) target = $region32
        $region31: #{laynormal_forward.1} parent=11 // pred_region
          _
        $region32: #{laynormal_forward.1} parent=11 // pred_fallthru
          _
        // Predicated region
        $region33: #{laynormal_forward.1} parent=11 // pred_check
          %p282 = pneg %p174
        $region34: #{laynormal_forward.1} parent=11 // pred_check_branch
          %284 = sbr.rel (%p282) target = $region36
        $region35: #{laynormal_forward.1} parent=11 // pred_region
          _
        $region36: #{laynormal_forward.1} parent=11 // pred_fallthru
          _
      $region12: #{laynormal_forward.1} parent=5 // pred_fallthru
        _
      %p285 = scmp.lt.s32.totalorder %s22, 2
      // Predicated region
      $region37: #{laynormal_forward.1} parent=5 // pred_check
        %p286 = pneg %p285
      $region38: #{laynormal_forward.1} parent=5 // pred_check_branch
        %288 = sbr.rel (%p286) target = $region40
      $region39: #{laynormal_forward.1} parent=5 // pred_region
        // Predicated region
        $region41: #{laynormal_forward.1} parent=39 // pred_check
          %p289 = pneg %p42
        $region42: #{laynormal_forward.1} parent=39 // pred_check_branch
          %291 = sbr.rel (%p289) target = $region44
        $region43: #{laynormal_forward.1} parent=39 // pred_region
          %p292 = scmp.lt.s32.totalorder %s22, 1
          %s293 = scalar_select %p292, %s22, 1
          %s294 = smul.addr %s293, 2
          %s295 = smul.addr %s294, 4
          %s296 = scalar_lea.vmem %s0, %s295
        $region44: #{laynormal_forward.1} parent=39 // pred_fallthru
          _
      $region40: #{laynormal_forward.1} parent=5 // pred_fallthru
        _
      %p297 = scmp.le.s32.totalorder 1, %s22
      %p298 = scmp.lt.s32.totalorder %s22, 3
      %p299 = pnand %p297, %p298
      %p300 = pneg %p299
      // Predicated region
      $region45: #{laynormal_forward.1} parent=5 // pred_check
        _
      $region46: #{laynormal_forward.1} parent=5 // pred_check_branch
        %302 = sbr.rel (%p299) target = $region48
      $region47: #{laynormal_forward.1} parent=5 // pred_region
        %s303 = ssub.s32 %s22, 1
        %p304 = scmp.lt.s32.totalorder %s27, 1
        %s305 = scalar_select %p304, %s27, 1
        %s306 = smul.addr %s305, 2
        %s307 = smul.addr %s306, 4
        %s308 = scalar_lea.vmem %s0, %s307
        %p309 = pneg %p48
        %p310 = pneg %p45
        %p311 = pneg %p69
        %p312 = pneg %p66
        %p313 = pneg %p90
        %p314 = pneg %p87
        %p315 = pneg %p111
        %p316 = pneg %p108
        %p317 = pneg %p132
        %p318 = pneg %p129
        %p319 = pneg %p153
        %p320 = pneg %p150
        %p321 = pneg %p174
        %p322 = pneg %p171
        %p323 = pneg %p200
        %p324 = pneg %p197
        %p325 = scmp.lt.s32.totalorder %s27, 1
        %s326 = scalar_select %p325, %s27, 1
        %s327 = smul.addr %s326, 2
        %s328 = smul.addr %s327, 4
        %s329 = scalar_lea.vmem %s7, %s328
        %p330 = pneg %p226
        %p331 = pneg %p223
        %s332 = sand.u32 %s213, 1
        %s333 = scalar_lea.sflag [#allocation3], %s332
        %s334 = sand.u32 %s213, 1
        %s335 = scalar_lea.vmem [#allocation2], %s334
        %p336 = pneg %p252
        %p337 = pneg %p249
        %s338 = sand.u32 %s239, 1
        %s339 = scalar_lea.sflag [#allocation5], %s338
        %s340 = sand.u32 %s239, 1
        %s341 = scalar_lea.vmem [#allocation4], %s340
        %p342 = scmp.lt.s32.totalorder %s27, 1
        %s343 = scalar_select %p342, %s27, 1
        %s344 = smul.addr %s343, 2
        %s345 = smul.addr %s344, 4
        %s346 = scalar_lea.vmem %s0, %s345
        %p347 = scmp.lt.s32.totalorder %s27, 1
        %s348 = scalar_select %p347, %s27, 1
        %s349 = smul.addr %s348, 2
        %s350 = smul.addr %s349, 4
        %s351 = scalar_lea.vmem %s7, %s350
        %v352 = vld [vmem:[%s346] sm:$0xff]
        %v354 = vcombine.high %v352, %v352
        %vm356 = vcmask 1043456
        %v357 = vsel %vm356, %v352, 0.0
        %v358 = vsel %vm356, %v354, 0.0
        %v359 = vadd.f32 %v357, %v358
        %360 = vadd.xlane.f32.xlu0 %v359
        %v361 = vpop.xlane.xlu0 %360
        %v362 = vsel %vm356, %v361, 0.0
        %v363 = vrot.slane %v362, 4
        %v364 = vadd.f32 %v362, %v363
        %v365 = vrot.slane %v364, 2
        %v366 = vadd.f32 %v364, %v365
        %v367 = vrot.slane %v366, 1
        %v368 = vadd.f32 %v366, %v367
        %v369 = vmul.f32 %v352, %v352
        %v371 = vcombine.high %v369, %v369
        %v373 = vsel %vm356, %v369, 0.0
        %v374 = vsel %vm356, %v371, 0.0
        %v375 = vadd.f32 %v373, %v374
        %376 = vadd.xlane.f32.xlu0 %v375
        %v377 = vpop.xlane.xlu0 %376
        %v378 = vsel %vm356, %v377, 0.0
        %v379 = vrot.slane %v378, 4
        %v380 = vadd.f32 %v378, %v379
        %v381 = vrot.slane %v380, 2
        %v382 = vadd.f32 %v380, %v381
        %v383 = vrot.slane %v382, 1
        %v384 = vadd.f32 %v382, %v383
        %v385 = vmul.f32 %v368, 0.0009765625
        %v386 = vmul.f32 %v384, 0.0009765625
        %v387 = vmul.f32 %v385, %v385
        %v388 = vsub.f32 %v386, %v387
        %v389 = vmax.f32 %v388, 0.0
        %v390 = vadd.f32 %v389, 1e-05
        %v391 = vrsqrt.pop %v390
        %v392 = vmul.f32 %v390, %v391
        %vm393 = vcmp.eq.f32.partialorder %v390, inf
        %v394 = vsel %vm393, %v390, %v392
        %vm395 = vcmp.eq.f32.partialorder %v390, 0.0
        %v396 = vand.u32 %v390, 2147483648
        %v397 = vsel %vm395, %v396, %v394
        %v398 = vrcp.pop %v397
        %v399 = vmul.f32 1.0, %v398
        %v400 = vld [vmem:[%s1] sm:$0xf]
        %v401 = vld [vmem:[%s2] sm:$0xf]
        %v402 = vmul.f32 %v400, %v399
        %v403 = vmul.f32 %v385, %v402
        %v404 = vsub.f32 %v401, %v403
        %406 = vset.pattern.permute.xlu0 0
        %407 = vperm.xlu0 %406, %v402
        %v408 = vpop.permute.xlu0 %407
        %v410 = vunpack.c.l.s4 839922192
        %v411 = vunpack.c.0.s8 %v410
        %v412 = vlaneseq
        %v413 = vshrl.u32 %v412, 7
        %v414 = vsub.s32 %v411, %v413
        %v415 = vrot.slane %v408, %v414
        %v417 = vmul.f32 %v352, %v415
        %419 = vset.pattern.permute.xlu0 0
        %420 = vperm.xlu0 %419, %v404
        %v421 = vpop.permute.xlu0 %420
        %v423 = vunpack.c.l.s4 839922192
        %v424 = vunpack.c.0.s8 %v423
        %v425 = vlaneseq
        %v426 = vshrl.u32 %v425, 7
        %v427 = vsub.s32 %v424, %v426
        %v428 = vrot.slane %v421, %v427
        %v430 = vadd.f32 %v417, %v428
        %431 = vst [vmem:[%s351] sm:$0xff] %v430
        %v432 = vld [vmem:[%s3] sm:$0x1]
        %v433 = vmul.f32 %v432, %v397
        %v434 = vld [vmem:[%s4] sm:$0x1]
        %v435 = vadd.f32 %v433, %v434
        %vm436 = vcmask 24576
        %437 = vst.msk [vmem:[%s335] sm:$0x1] %vm436, %v435
        %v438 = vld [vmem:[%s5] sm:$0x1]
        %v439 = vmul.f32 %v438, %v385
        %v440 = vld [vmem:[%s6] sm:$0x1]
        %v441 = vadd.f32 %v439, %v440
        %442 = vst.msk [vmem:[%s341] sm:$0x1] %vm436, %v441
        %p443 = scmp.lt.s32.totalorder %s27, 1
        %s444 = scalar_select %p443, %s27, 1
        %s445 = smul.addr %s444, 2
        %s446 = smul.addr %s445, 4
        %s447 = scalar_lea.vmem %s7, %s446
        %s448 = sand.u32 %s213, 1
        %s449 = scalar_lea.sflag [#allocation3], %s448
        %s450 = sand.u32 %s213, 1
        %s451 = scalar_lea.vmem [#allocation2], %s450
        %s452 = sand.u32 %s239, 1
        %s453 = scalar_lea.sflag [#allocation5], %s452
        %s454 = sand.u32 %s239, 1
        %s455 = scalar_lea.vmem [#allocation4], %s454
        // Predicated region
        $region49: #{laynormal_forward.1} parent=47 // pred_check
          %p456 = pneg %p197
        $region50: #{laynormal_forward.1} parent=47 // pred_check_branch
          %458 = sbr.rel (%p456) target = $region52
        $region51: #{laynormal_forward.1} parent=47 // pred_region
          _
        $region52: #{laynormal_forward.1} parent=47 // pred_fallthru
          _
        // Predicated region
        $region53: #{laynormal_forward.1} parent=47 // pred_check
          %p459 = pneg %p223
        $region54: #{laynormal_forward.1} parent=47 // pred_check_branch
          %461 = sbr.rel (%p459) target = $region56
        $region55: #{laynormal_forward.1} parent=47 // pred_region
          %s463 = ssub.s32 16, 16
          %464 = vsyncadd %s449, %s463
          %s465 = smul.addr %s27, 16
          %s466 = scalar_lea.hbm %s8, %s465
          %s468 = sshll.u32 %s451, 4
          %s469 = int_to_ptr.vmem [resolvable:$true] %s468
          %471 = dma.vmem_to_hbm [thread:$0]  %s469, 16, %s466, %s449
        $region56: #{laynormal_forward.1} parent=47 // pred_fallthru
          _
        // Predicated region
        $region57: #{laynormal_forward.1} parent=47 // pred_check
          %p472 = pneg %p249
        $region58: #{laynormal_forward.1} parent=47 // pred_check_branch
          %474 = sbr.rel (%p472) target = $region60
        $region59: #{laynormal_forward.1} parent=47 // pred_region
          %s476 = ssub.s32 16, 16
          %477 = vsyncadd %s453, %s476
          %s478 = smul.addr %s27, 16
          %s479 = scalar_lea.hbm %s9, %s478
          %s481 = sshll.u32 %s455, 4
          %s482 = int_to_ptr.vmem [resolvable:$true] %s481
          %484 = dma.vmem_to_hbm [thread:$0]  %s482, 16, %s479, %s453
        $region60: #{laynormal_forward.1} parent=47 // pred_fallthru
          _
      $region48: #{laynormal_forward.1} parent=5 // pred_fallthru
        _
      %p485 = scmp.le.s32.totalorder 2, %s22
      // Predicated region
      $region61: #{laynormal_forward.1} parent=5 // pred_check
        %p486 = pneg %p485
      $region62: #{laynormal_forward.1} parent=5 // pred_check_branch
        %488 = sbr.rel (%p486) target = $region64
      $region63: #{laynormal_forward.1} parent=5 // pred_region
        %s489 = ssub.s32 %s22, 2
        // Predicated region
        $region65: #{laynormal_forward.1} parent=63 // pred_check
          %p490 = pneg %p203
        $region66: #{laynormal_forward.1} parent=63 // pred_check_branch
          %492 = sbr.rel (%p490) target = $region68
        $region67: #{laynormal_forward.1} parent=63 // pred_region
          %p493 = scmp.lt.s32.totalorder %s28, 1
          %s494 = scalar_select %p493, %s28, 1
          %s495 = smul.addr %s494, 2
          %s496 = smul.addr %s495, 4
          %s497 = scalar_lea.vmem %s7, %s496
        $region68: #{laynormal_forward.1} parent=63 // pred_fallthru
          _
        // Predicated region
        $region69: #{laynormal_forward.1} parent=63 // pred_check
          %p498 = pneg %p229
        $region70: #{laynormal_forward.1} parent=63 // pred_check_branch
          %500 = sbr.rel (%p498) target = $region72
        $region71: #{laynormal_forward.1} parent=63 // pred_region
          %s501 = sand.u32 %s214, 1
          %s502 = scalar_lea.sflag [#allocation3], %s501
          %s503 = sand.u32 %s214, 1
          %s504 = scalar_lea.vmem [#allocation2], %s503
          %505 = dma.done %s502, 16
        $region72: #{laynormal_forward.1} parent=63 // pred_fallthru
          _
        // Predicated region
        $region73: #{laynormal_forward.1} parent=63 // pred_check
          %p506 = pneg %p255
        $region74: #{laynormal_forward.1} parent=63 // pred_check_branch
          %508 = sbr.rel (%p506) target = $region76
        $region75: #{laynormal_forward.1} parent=63 // pred_region
          %s509 = sand.u32 %s240, 1
          %s510 = scalar_lea.sflag [#allocation5], %s509
          %s511 = sand.u32 %s240, 1
          %s512 = scalar_lea.vmem [#allocation4], %s511
          %513 = dma.done %s510, 16
        $region76: #{laynormal_forward.1} parent=63 // pred_fallthru
          _
      $region64: #{laynormal_forward.1} parent=5 // pred_fallthru
        _
    $region6: #{laynormal_forward.1} parent=1 // loop_footer
      %s26 = sadd.s32 1, %s22
    $region7: #{laynormal_forward.1} parent=1 // loop_footer_branch
      %21 = sbr.rel target = $region3
    $region8: #{laynormal_forward.1} parent=1 // loop_exit
      _
    %514 = vsyncpa [#allocation3], 1
    %s515 = scalar_lea.sflag [#allocation3], 1
    %516 = vsyncpa %s515, 1
    %517 = vsyncpa [#allocation5], 1
    %s518 = scalar_lea.sflag [#allocation5], 1
    %519 = vsyncpa %s518, 1

</llo_original>
